<compile_context>
chip_gen: v7x
topology: tpu7x:2x2x1
jax: 0.10.0
libtpu: 0.0.40
codegen_flags: <defaults>
</compile_context>

<pallas_src>
import functools
import math

import numpy as np
import jax
import jax.numpy as jnp
from jax.experimental import pallas as pl
from jax.experimental.pallas import tpu as pltpu


MXU_DTYPE = jnp.bfloat16          # MXU operand dtype (f32 accumulation everywhere)
# Tiles below stay <= ~8 MiB double-buffered, so 32 MiB scoped VMEM is plenty on
# v5e/v6e (128 MiB physical) and leaves headroom on v7x (64 MiB physical).
_VMEM_LIMIT = 32 * 1024 * 1024


# ----------------------------------------------------------------------------------
# small helpers
# ----------------------------------------------------------------------------------
def _round_up(v, m):
    return ((v + m - 1) // m) * m


def _row_tile(n, unit, tmax):
    """Row tile: multiple of `unit`, capped at tmax. Grid is pl.cdiv(n, tile)."""
    return min(tmax, _round_up(max(n, 1), unit))


def _cparams(semantics):
    return pltpu.CompilerParams(dimension_semantics=semantics,
                                vmem_limit_bytes=_VMEM_LIMIT)


# ----------------------------------------------------------------------------------
# Pallas kernels
# ----------------------------------------------------------------------------------
def _raconv_proj_full_kernel(x_ref, w_ref, al_ref, ar_ref, xl_ref, alpha_ref):
    # MXU: x @ W (bf16 operands, f32 acc); VPU/XLU: attention logits.
    xb = x_ref[...].astype(MXU_DTYPE)
    xl = jnp.dot(xb, w_ref[...], preferred_element_type=jnp.float32)
    xl_ref[...] = xl.astype(xl_ref.dtype)                    # bf16 store of x_l
    a_l = jnp.sum(xl * al_ref[...], axis=-1, keepdims=True)  # (tm, 1)
    a_r = jnp.sum(xl * ar_ref[...], axis=-1, keepdims=True)  # (tm, 1)
    lane = jax.lax.broadcasted_iota(jnp.int32, alpha_ref.shape, 1)
    alpha_ref[...] = jnp.where(lane == 0, a_l, jnp.where(lane == 1, a_r, 0.0))


def _raconv_proj_alpha_kernel(x_ref, w_ref, al_ref, ar_ref, alpha_ref):
    # Same as above but the projection itself is never written back (discarded
    # in the reference for the t_x branch) -> drops the dominant HBM store.
    xb = x_ref[...].astype(MXU_DTYPE)
    xl = jnp.dot(xb, w_ref[...], preferred_element_type=jnp.float32)
    a_l = jnp.sum(xl * al_ref[...], axis=-1, keepdims=True)
    a_r = jnp.sum(xl * ar_ref[...], axis=-1, keepdims=True)
    lane = jax.lax.broadcasted_iota(jnp.int32, alpha_ref.shape, 1)
    alpha_ref[...] = jnp.where(lane == 0, a_l, jnp.where(lane == 1, a_r, 0.0))


def raconv_project_pallas(x, w_t, att_l, att_r, write_xl=True, tm=512):
    """Fused x_l = x @ W and alpha_l/r = sum(x_l * att_l/r, -1).

    If write_xl is False only the (n, 8) alpha slab is emitted (lane 0 = alpha_l,
    lane 1 = alpha_r). x stays f32 in HBM and is cast to bf16 in-registers.
    """
    x = jnp.asarray(x, jnp.float32)
    n, k = x.shape
    c = int(w_t.shape[1])
    t = _row_tile(n, 32, tm)                      # 32: safe for bf16 sublane packing
    grid = (pl.cdiv(n, t),)
    wb = jnp.asarray(w_t).astype(MXU_DTYPE)
    al = jnp.asarray(att_l, jnp.float32).reshape(1, c)
    ar = jnp.asarray(att_r, jnp.float32).reshape(1, c)

    # TODO(synk): pipeline_mode=pl.Buffered(1) on the grid-invariant operands (wb,
    # al, ar) would avoid double-buffering constants; VMEM pressure is low here.
    in_specs = [pl.BlockSpec((t, k), lambda i: (i, 0)),
                pl.BlockSpec((k, c), lambda i: (0, 0)),
                pl.BlockSpec((1, c), lambda i: (0, 0)),
                pl.BlockSpec((1, c), lambda i: (0, 0))]
    cost = pl.CostEstimate(
        flops=2 * grid[0] * t * k * c + 4 * grid[0] * t * c, transcendentals=0,
        bytes_accessed=4 * n * k + 2 * k * c + 8 * c
                       + (2 * n * c if write_xl else 0) + 4 * n * 8)

    if write_xl:
        xl, alphas = pl.pallas_call(
            _raconv_proj_full_kernel,
            out_shape=(jax.ShapeDtypeStruct((n, c), MXU_DTYPE),
                       jax.ShapeDtypeStruct((n, 8), jnp.float32)),
            grid=grid, in_specs=in_specs,
            out_specs=[pl.BlockSpec((t, c), lambda i: (i, 0)),
                       pl.BlockSpec((t, 8), lambda i: (i, 0))],
            compiler_params=_cparams(("parallel",)),
            cost_estimate=cost,
        )(x, wb, al, ar)
        return xl, alphas[:, 0], alphas[:, 1]

    alphas = pl.pallas_call(
        _raconv_proj_alpha_kernel,
        out_shape=jax.ShapeDtypeStruct((n, 8), jnp.float32),
        grid=grid, in_specs=in_specs,
        out_specs=pl.BlockSpec((t, 8), lambda i: (i, 0)),
        compiler_params=_cparams(("parallel",)),
        cost_estimate=cost,
    )(x, wb, al, ar)
    return alphas[:, 0], alphas[:, 1]


def _layernorm_kernel(x_ref, g_ref, b_ref, o_ref, *, eps):
    x = x_ref[...]
    mu = jnp.mean(x, axis=-1, keepdims=True)
    xc = x - mu
    var = jnp.mean(xc * xc, axis=-1, keepdims=True)
    o_ref[...] = xc * jax.lax.rsqrt(var + eps) * g_ref[...] + b_ref[...]


def layernorm_pallas(x, gamma, beta, eps=1e-5, tm=1024):
    # TODO(synk): reference `LayerNorm` symbol is ambiguous (torch.nn vs
    # torch_geometric); standard per-node LayerNorm over features is used here.
    x = jnp.asarray(x, jnp.float32)
    n, d = x.shape
    t = _row_tile(n, 8, tm)
    return pl.pallas_call(
        functools.partial(_layernorm_kernel, eps=eps),
        out_shape=jax.ShapeDtypeStruct((n, d), jnp.float32),
        grid=(pl.cdiv(n, t),),
        in_specs=[pl.BlockSpec((t, d), lambda i: (i, 0)),
                  pl.BlockSpec((1, d), lambda i: (0, 0)),
                  pl.BlockSpec((1, d), lambda i: (0, 0))],
        out_specs=pl.BlockSpec((t, d), lambda i: (i, 0)),
        compiler_params=_cparams(("parallel",)),
    )(x, jnp.asarray(gamma, jnp.float32).reshape(1, d),
       jnp.asarray(beta, jnp.float32).reshape(1, d))


def _ln_fitness_kernel(x_ref, g_ref, b_ref, w_ref, o_ref, fit_ref, *, eps, pre_relu):
    # relu -> LayerNorm -> two fitness dot products, all in one pass over x.
    x = x_ref[...]
    if pre_relu:
        x = jnp.maximum(x, 0.0)
    mu = jnp.mean(x, axis=-1, keepdims=True)
    xc = x - mu
    var = jnp.mean(xc * xc, axis=-1, keepdims=True)
    y = xc * jax.lax.rsqrt(var + eps) * g_ref[...] + b_ref[...]
    o_ref[...] = y
    f1 = jnp.tanh(jnp.sum(y * w_ref[0:1, :], axis=-1, keepdims=True))   # weight_1
    f2 = jnp.tanh(jnp.sum(y * w_ref[1:2, :], axis=-1, keepdims=True))   # weight_2
    lane = jax.lax.broadcasted_iota(jnp.int32, fit_ref.shape, 1)
    fit_ref[...] = jnp.where(lane == 0, f1, jnp.where(lane == 1, f2, 0.0))


def layernorm_fitness_pallas(x, gamma, beta, w1_norm, w2_norm,
                             eps=1e-5, pre_relu=True, tm=1024):
    """Fused relu -> LayerNorm -> IHPool fitness (tanh(x . w/||w||) per node).

    Returns (x_norm (n, d) f32, fit (n, 8) f32 with lane0=weight_1, lane1=weight_2).
    """
    x = jnp.asarray(x, jnp.float32)
    n, d = x.shape
    t = _row_tile(n, 8, tm)
    w = jnp.stack([jnp.asarray(w1_norm, jnp.float32),
                   jnp.asarray(w2_norm, jnp.float32)], axis=0)          # (2, d)
    return pl.pallas_call(
        functools.partial(_ln_fitness_kernel, eps=eps, pre_relu=pre_relu),
        out_shape=(jax.ShapeDtypeStruct((n, d), jnp.float32),
                   jax.ShapeDtypeStruct((n, 8), jnp.float32)),
        grid=(pl.cdiv(n, t),),
        in_specs=[pl.BlockSpec((t, d), lambda i: (i, 0)),
                  pl.BlockSpec((1, d), lambda i: (0, 0)),
                  pl.BlockSpec((1, d), lambda i: (0, 0)),
                  pl.BlockSpec((2, d), lambda i: (0, 0))],
        out_specs=[pl.BlockSpec((t, d), lambda i: (i, 0)),
                   pl.BlockSpec((t, 8), lambda i: (i, 0))],
        compiler_params=_cparams(("parallel",)),
    )(x, jnp.asarray(gamma, jnp.float32).reshape(1, d),
       jnp.asarray(beta, jnp.float32).reshape(1, d), w)


def _meanpool_kernel(x_ref, o_ref, *, n_rows, tile, inv_n):
    i = pl.program_id(0)

    @pl.when(i == 0)
    def _init():
        o_ref[...] = jnp.zeros_like(o_ref)

    # Mask the ragged tail rows (no host-side zero padding anymore).
    row = i * tile + jax.lax.broadcasted_iota(jnp.int32, x_ref.shape, 0)
    xv = jnp.where(row < n_rows, x_ref[...], 0.0)
    o_ref[...] += jnp.sum(xv, axis=0, keepdims=True)

    @pl.when(i == pl.num_programs(0) - 1)
    def _fin():
        o_ref[...] = o_ref[...] * inv_n


def global_mean_pool_pallas(x, tm=1024):
    # TODO(synk): on v7x a two-stage reduction (parallel per-core partials + tiny
    # final sum) would use both TensorCores; the serial accumulate is fine at these N.
    x = jnp.asarray(x, jnp.float32)
    n, d = x.shape
    t = _row_tile(n, 8, tm)
    return pl.pallas_call(
        functools.partial(_meanpool_kernel, n_rows=n, tile=t, inv_n=1.0 / float(n)),
        out_shape=jax.ShapeDtypeStruct((1, d), jnp.float32),
        grid=(pl.cdiv(n, t),),
        in_specs=[pl.BlockSpec((t, d), lambda i: (i, 0))],
        out_specs=pl.BlockSpec((1, d), lambda i: (0, 0)),
        compiler_params=_cparams(("arbitrary",)),   # output block revisited
    )(x)


# ----------------------------------------------------------------------------------
# On-device segment reductions (edge scatter / pooled features)
# ----------------------------------------------------------------------------------
def segment_sum_dev(src, index, num_segments):
    return jax.ops.segment_sum(src, index, num_segments=num_segments)


def segment_mean_dev(src, index, num_segments):
    sums = jax.ops.segment_sum(src, index, num_segments=num_segments)
    cnt = jax.ops.segment_sum(jnp.ones((src.shape[0],), jnp.float32), index,
                              num_segments=num_segments)
    return sums / jnp.maximum(cnt, 1.0)[:, None]


def _segment_softmax(vals, seg_ids, num_segments):
    seg_max = jax.ops.segment_max(vals, seg_ids, num_segments=num_segments)
    seg_max = jnp.where(jnp.isfinite(seg_max), seg_max, 0.0)
    ex = jnp.exp(vals - seg_max[seg_ids])
    denom = jax.ops.segment_sum(ex, seg_ids, num_segments=num_segments)
    return ex / (denom[seg_ids] + 1e-16)


# ----------------------------------------------------------------------------------
# host-side helpers (data-dependent IHPool bookkeeping)
# ----------------------------------------------------------------------------------
def _euclidean_dist_np(a, b):
    d_xy = np.sqrt(((a[:, None, 0:2] - b[None, :, 0:2]) ** 2).sum(-1))
    d_f = np.abs(a[:, None, 2] - b[None, :, 2])
    return d_xy + d_f


def _scatter_mean_np(src, index):
    dim_size = int(index.max()) + 1
    out = np.zeros((dim_size,) + src.shape[1:], dtype=np.float32)
    cnt = np.zeros((dim_size,), dtype=np.float32)
    np.add.at(out, index, src.astype(np.float32))
    np.add.at(cnt, index, 1.0)
    cnt = np.maximum(cnt, 1.0)
    return out / cnt.reshape((-1,) + (1,) * (src.ndim - 1))


# ----------------------------------------------------------------------------------
# RAConv (heads=1, concat=True, add_self_loops=False, dropout=0)
# ----------------------------------------------------------------------------------
def raconv_forward(p, x, edge_index, node_type, negative_slope=0.2):
    x = jnp.asarray(x, jnp.float32)
    n = x.shape[0]
    src_np = np.asarray(edge_index[0])
    dst_np = np.asarray(edge_index[1])
    node_type_np = np.asarray(node_type)
    src = jnp.asarray(src_np, jnp.int32)
    dst = jnp.asarray(dst_np, jnp.int32)

    # fused projection + attention logits (x_l kept, stored bf16)
    x_l, alpha_l, alpha_r = raconv_project_pallas(
        x, p["lin_l_wt"], p["att_l"], p["att_r"], write_xl=True)

    # type-aware cluster features: scatter-mean of source feats by (type, target)
    new_index_np = node_type_np[src_np] + dst_np * 3
    m = int(new_index_np.max()) + 1
    new_index = jnp.asarray(new_index_np, jnp.int32)
    t_x_mean = segment_mean_dev(x[src], new_index, m)              # (M, in)
    t_x = jnp.concatenate([x, t_x_mean], axis=0)                   # (N+M, in)
    # projection of t_x is discarded in the reference -> alphas-only kernel
    t_alpha_l, t_alpha_r = raconv_project_pallas(
        t_x, p["t_lin_l_wt"], p["t_att_l"], p["t_att_r"], write_xl=False)

    uniq_np = np.unique(new_index_np)                              # sorted unique
    start = jnp.asarray(uniq_np + n, jnp.int32)
    end = jnp.asarray(uniq_np // 3, jnp.int32)

    # first propagate (aggregation discarded in the reference; only t_alpha matters)
    a_t = jax.nn.leaky_relu(t_alpha_l[start] + t_alpha_r[end], negative_slope)
    t_alpha = _segment_softmax(a_t, end, n + m)

    # second propagate over the real edges
    a = jax.nn.leaky_relu(alpha_l[src] + alpha_r[dst], negative_slope)
    a = _segment_softmax(a, new_index, m)
    pos = jnp.asarray(np.searchsorted(uniq_np, new_index_np), jnp.int32)
    a = t_alpha[pos] * a                                           # hierarchical gate
    msgs = x_l[src].astype(jnp.float32) * a[:, None]               # (E, C)
    out = segment_sum_dev(msgs, dst, n) + jnp.asarray(p["bias"], jnp.float32)[None, :]
    return out


# ----------------------------------------------------------------------------------
# IHPool (select='inter', dis='ou') — fitness precomputed on-device (fused into LN)
# ----------------------------------------------------------------------------------
def ihpool_forward(x, fit_np, edge_index, node_type, tree, x_y_index, ratio):
    # TODO(synk): the data-dependent clustering control flow (sort / set / argmin /
    # per-cluster loop, dynamic output sizes) has no static-shape Pallas equivalent;
    # it runs host-side. Only the tiny (N, 2) fitness table is synced to the host;
    # pooled node features stay on device.
    x = jnp.asarray(x, jnp.float32)
    n = x.shape[0]
    node_type = np.asarray(node_type)
    tree = np.asarray(tree)
    x_y_index = np.asarray(x_y_index, np.float32)

    # add_remaining_self_loops
    src, dst = np.asarray(edge_index[0]), np.asarray(edge_index[1])
    keep = src != dst
    src = np.concatenate([src[keep], np.arange(n)])
    dst = np.concatenate([dst[keep], np.arange(n)])
    edge_index = np.stack([src, dst])
    edge_weight = np.ones(len(src), np.float32)

    idx1 = np.where(node_type == 1)[0]
    idx2 = np.where(node_type == 2)[0]
    n1, n2 = len(idx1), len(idx2)

    # --- level-1 clustering (fitness came from the fused LN kernel) ---
    fitness_1 = np.asarray(fit_np[idx1, 0], np.float32)
    xyf_1 = np.concatenate([x_y_index[idx1], fitness_1[:, None]], axis=1)
    sort_idx_1 = np.argsort(fitness_1)
    if ratio < 1:
        step1 = int(math.ceil(n1 / (n1 * ratio)))
    elif n1 < ratio:
        step1 = int(math.ceil(n1 / n1))
    else:
        step1 = int(math.ceil(n1 / ratio))
    thr_idx_1 = sort_idx_1[np.arange(0, n1, step1)]
    d1 = _euclidean_dist_np(xyf_1[thr_idx_1], xyf_1)
    cluster_1 = np.argmin(d1, axis=0)

    new_xy_1 = _scatter_mean_np(x_y_index[idx1], cluster_1)
    new_x_y_index = np.concatenate([np.zeros((1, 2), np.float32), new_xy_1], axis=0)

    # --- level-2 per-parent clustering loop (replicates the reference exactly,
    #     including the `== uniq_c1[k]` select vs `== k` assign masks) ---
    fitness_2 = np.asarray(fit_np[idx2, 1], np.float32)
    xyf_2 = np.concatenate([x_y_index[idx2], fitness_2[:, None]], axis=1)
    xy_2 = x_y_index[idx2]

    cluster_2 = np.zeros(n2, np.int64)
    tree2 = tree[idx2]
    cluster2_from_1 = cluster_1[tree2 - tree2.min()]
    new_tree = np.concatenate(
        [np.array([-1], np.int64), np.zeros(len(set(cluster_1.tolist())), np.int64)])

    uniq_c1 = sorted(set(cluster_1.tolist()))
    for k in range(len(uniq_c1)):
        val = uniq_c1[k]
        sel = np.where(cluster2_from_1 == val)[0]
        n_k = len(sel)
        after_fit = fitness_2[sel]
        after_xyf = xyf_2[sel]
        t_xy = xy_2[sel]
        sort_idx_2 = np.argsort(after_fit)
        if ratio < 1:
            step2 = int(math.ceil(n_k / (n_k * ratio)))
        elif n_k == 1:
            step2 = n_k
        else:
            step2 = n_k - 1
        thr_idx_2 = sort_idx_2[np.arange(0, n_k, step2)]
        d2 = _euclidean_dist_np(after_xyf[thr_idx_2], after_xyf)
        t_cluster_2 = np.argmin(d2, axis=0)
        new_x_y_index = np.concatenate(
            [new_x_y_index, _scatter_mean_np(t_xy, t_cluster_2)], axis=0)
        t_cluster_2 = t_cluster_2 + len(set(cluster_2.tolist())) * 2
        cluster_2[np.where(cluster2_from_1 == k)[0]] = t_cluster_2
        new_tree = np.concatenate(
            [new_tree, np.full(len(set(t_cluster_2.tolist())), k + 1, np.int64)])

    # --- global cluster assignment & coarsening ---
    cluster = np.arange(n, dtype=np.int64)
    cluster[node_type == 0] = 0
    cluster[node_type == 1] = cluster_1 + 1
    cluster[node_type == 2] = cluster_2 + len(cluster_1) + 100
    uniq_all = np.array(sorted(set(cluster.tolist())), np.int64)
    cluster = np.searchsorted(uniq_all, cluster)
    n_new = len(uniq_all)

    node_type_new = np.concatenate([
        np.array([0], np.int64),
        np.ones(len(set(cluster_1.tolist())), np.int64),
        np.full(len(set(cluster_2.tolist())), 2, np.int64)])

    # pooled node features: on-device segment mean
    x_new = segment_mean_dev(x, jnp.asarray(cluster, jnp.int32), n_new)

    # coarsen adjacency (host metadata only)
    a_dense = np.zeros((n, n), np.float32)
    a_dense[edge_index[0], edge_index[1]] = 1.0
    onehot = (cluster[None, :] == np.arange(n_new)[:, None]).astype(np.float32)
    a_new = onehot @ a_dense @ onehot.T
    row, col = np.where(a_new != 0)
    edge_index_new = np.stack([row, col])

    batch_new = np.zeros(n_new, np.int64)
    fitness = np.concatenate([np.zeros(1, np.float32), fitness_1, fitness_2])
    return (x_new, edge_index_new, edge_weight, batch_new, cluster,
            node_type_new, new_tree, fitness, new_x_y_index)


# ----------------------------------------------------------------------------------
# MIL parameters + forward
# ----------------------------------------------------------------------------------
def _uniform(key, shape, bound):
    return jax.random.uniform(key, shape, jnp.float32, -bound, bound)


def init_raconv(key, in_c, out_c):
    ks = jax.random.split(key, 6)
    g_lin = math.sqrt(6.0 / (in_c + out_c))
    g_att = math.sqrt(6.0 / (1 + out_c))
    return dict(
        lin_l_wt=_uniform(ks[0], (in_c, out_c), g_lin),
        t_lin_l_wt=_uniform(ks[1], (in_c, out_c), g_lin),
        att_l=_uniform(ks[2], (out_c,), g_att),
        att_r=_uniform(ks[3], (out_c,), g_att),
        t_att_l=_uniform(ks[4], (out_c,), g_att),
        t_att_r=_uniform(ks[5], (out_c,), g_att),
        bias=jnp.zeros((out_c,), jnp.float32),
    )


def init_mil_params(key, in_feats, out_classes, hidden=512,
                    pool1_ratio=0.1, pool2_ratio=4):
    ks = jax.random.split(key, 10)
    half = hidden // 2
    return dict(
        norm0_g=jnp.ones((in_feats,), jnp.float32),
        norm0_b=jnp.zeros((in_feats,), jnp.float32),
        norm_g=jnp.ones((hidden,), jnp.float32),
        norm_b=jnp.zeros((hidden,), jnp.float32),
        norm1_g=jnp.ones((half,), jnp.float32),
        norm1_b=jnp.zeros((half,), jnp.float32),
        conv1=init_raconv(ks[0], in_feats, hidden),
        conv2=init_raconv(ks[1], hidden, hidden),
        pool_1=dict(weight_1=_uniform(ks[2], (hidden,), 1.0 / math.sqrt(hidden)),
                    weight_2=_uniform(ks[3], (hidden,), 1.0 / math.sqrt(hidden))),
        pool_2=dict(weight_1=_uniform(ks[4], (hidden,), 1.0 / math.sqrt(hidden)),
                    weight_2=_uniform(ks[5], (hidden,), 1.0 / math.sqrt(hidden))),
        pool1_ratio=pool1_ratio,
        pool2_ratio=pool2_ratio,
        lin1_wt=_uniform(ks[6], (hidden, half), 1.0 / math.sqrt(hidden)),
        lin1_b=_uniform(ks[7], (half,), 1.0 / math.sqrt(hidden)),
        lin2_wt=_uniform(ks[8], (half, out_classes), 1.0 / math.sqrt(half)),
        lin2_b=_uniform(ks[9], (half,) if False else (out_classes,), 1.0 / math.sqrt(half)),
    )


def _normed(w):
    w = jnp.asarray(w, jnp.float32)
    return w / jnp.linalg.norm(w)


def mil_forward(params, data):
    x = jnp.asarray(data["x"], jnp.float32)
    edge_index = np.asarray(data["edge_index_tree_8nb"])
    node_type = np.asarray(data["node_type"])
    tree = np.asarray(data["node_tree"])
    x_y_index = np.asarray(data["x_y_index"])

    # TODO(synk): norm0 could be fused as a prologue of the conv1 projection kernel,
    # but the LN'd x is also consumed by RAConv's type-aware scatter-mean, so it must
    # be materialized anyway; keep the standalone (narrow, 32-wide) LN pass.
    x = layernorm_pallas(x, params["norm0_g"], params["norm0_b"])
    x = raconv_forward(params["conv1"], x, edge_index, node_type)

    # relu -> LayerNorm -> pool_1 fitness dot products, fused into one pass
    x, fit = layernorm_fitness_pallas(
        x, params["norm_g"], params["norm_b"],
        _normed(params["pool_1"]["weight_1"]), _normed(params["pool_1"]["weight_2"]),
        pre_relu=True)
    # dropout: eval mode -> identity
    # TODO(synk): host sync for the data-dependent clustering; only (N, 2) scalars move.
    fit_np = np.asarray(fit[:, :2])
    (x, edge_index_1, _ew, _b, _c1, node_type_1, tree_1, _s1,
     x_y_index_1) = ihpool_forward(x, fit_np, edge_index, node_type, tree,
                                   x_y_index, ratio=params["pool1_ratio"])
    x1 = global_mean_pool_pallas(x)

    x = raconv_forward(params["conv2"], x, edge_index_1, node_type_1)
    x, fit = layernorm_fitness_pallas(
        x, params["norm_g"], params["norm_b"],
        _normed(params["pool_2"]["weight_1"]), _normed(params["pool_2"]["weight_2"]),
        pre_relu=True)
    # dropout: eval mode -> identity
    fit_np = np.asarray(fit[:, :2])
    (x, _ei2, _ew2, _b2, _c2, _nt2, _t2, _s2,
     _xy2) = ihpool_forward(x, fit_np, edge_index_1, node_type_1, tree_1,
                            x_y_index_1, ratio=params["pool2_ratio"])
    x2 = global_mean_pool_pallas(x)

    x = x1 + x2
    # (1, 512) head in plain XLA: a Pallas launch at this size is pure overhead.
    y = jnp.maximum(x @ params["lin1_wt"] + params["lin1_b"][None, :], 0.0)
    mu = jnp.mean(y, axis=-1, keepdims=True)
    yc = y - mu
    var = jnp.mean(yc * yc, axis=-1, keepdims=True)
    y = yc * jax.lax.rsqrt(var + 1e-5) * params["norm1_g"][None, :] \
        + params["norm1_b"][None, :]
    # dropout: eval mode -> identity
    y = jax.nn.sigmoid(y @ params["lin2_wt"] + params["lin2_b"][None, :])
    return y


# ----------------------------------------------------------------------------------
# Synthetic hierarchical graph + run
# ----------------------------------------------------------------------------------
def build_synthetic_data(key, in_feats):
    n1, per = 4, 4                      # 1 root + 4 region nodes + 16 patch nodes
    n = 1 + n1 + n1 * per
    node_type = np.zeros(n, np.int64)
    node_type[1:1 + n1] = 1
    node_type[1 + n1:] = 2
    tree = np.full(n, -1, np.int64)
    tree[1:1 + n1] = 0
    for p_i in range(n1):
        for c in range(per):
            tree[1 + n1 + p_i * per + c] = 1 + p_i

    edges = []
    for j in range(1, 1 + n1):                       # root <-> regions
        edges += [(0, j), (j, 0)]
    for a in range(1, n1):                           # region chain
        edges += [(a, a + 1), (a + 1, a)]
    for p_i in range(n1):
        parent = 1 + p_i
        children = [1 + n1 + p_i * per + c for c in range(per)]
        for c in children:                           # region <-> patches
            edges += [(parent, c), (c, parent)]
        for a, b in zip(children[:-1], children[1:]):  # patch neighbours
            edges += [(a, b), (b, a)]
    edge_index = np.array(edges, np.int64).T

    k1, k2 = jax.random.split(key)
    x = jax.random.normal(k1, (n, in_feats), jnp.float32)
    # np.array(...) copies -> writable host buffer (np.asarray of a jax array is RO)
    x_y = np.array(jax.random.uniform(k2, (n, 2), jnp.float32, 0.0, 10.0))
    x_y[0] = 0.0
    return dict(x=x,
                batch=np.zeros(n, np.int64),
                edge_index_tree_8nb=edge_index,
                node_type=node_type,
                node_tree=tree,
                x_y_index=x_y)


if __name__ == "__main__":
    key = jax.random.PRNGKey(0)
    k_data, k_param = jax.random.split(key)

    in_feats = 32          # args.in_classes
    out_classes = 2        # args.out_classes
    hidden = 512           # hard-coded in the reference module

    data = build_synthetic_data(k_data, in_feats)
    params = init_mil_params(k_param, in_feats, out_classes, hidden=hidden)

    out = mil_forward(params, data)
    out = jax.block_until_ready(out)

    assert out.shape == (1, out_classes)
    assert bool(jnp.all(jnp.isfinite(out)))
    assert bool(jnp.all((out >= 0.0) & (out <= 1.0)))   # sigmoid output
    print("KERNEL_OK")
</pallas_src>

<mosaic_0001>
module attributes {stable_mosaic.version = 11 : i64} {
  func.func @_layernorm_kernel(%arg0: i32, %arg1: memref<24x32xf32, #tpu.memory_space<vmem>>, %arg2: memref<1x32xf32, #tpu.memory_space<vmem>>, %arg3: memref<1x32xf32, #tpu.memory_space<vmem>>, %arg4: memref<24x32xf32, #tpu.memory_space<vmem>>) attributes {dimension_semantics = [#tpu.dimension_semantics<parallel>], iteration_bounds = array<i64: 1>, scalar_prefetch = 0 : i64, scratch_operands = 0 : i64, tpu.core_type = #tpu.core_type<tc>, window_params = [{transform_indices = @transform_0, window_bounds = array<i64: 24, 32>}, {pipeline_mode = #tpu.pipeline_mode<synchronous>, transform_indices = @transform_1, window_bounds = array<i64: 1, 32>}, {pipeline_mode = #tpu.pipeline_mode<synchronous>, transform_indices = @transform_2, window_bounds = array<i64: 1, 32>}, {transform_indices = @transform_3, window_bounds = array<i64: 24, 32>}]} {
    %c0 = arith.constant 0 : index
    %c0_0 = arith.constant 0 : index
    %0 = vector.load %arg1[%c0, %c0_0] : memref<24x32xf32, #tpu.memory_space<vmem>>, vector<24x32xf32>
    %cst = arith.constant dense<0.000000e+00> : vector<24xf32>
    %1 = vector.multi_reduction <add>, %0, %cst [1] : vector<24x32xf32> to vector<24xf32>
    %2 = vector.shape_cast %1 : vector<24xf32> to vector<24x1xf32>
    %cst_1 = arith.constant 3.200000e+01 : f32
    %3 = vector.broadcast %cst_1 : f32 to vector<24x1xf32>
    %4 = arith.divf %2, %3 : vector<24x1xf32>
    %5 = vector.broadcast %4 : vector<24x1xf32> to vector<24x32xf32>
    %6 = arith.subf %0, %5 : vector<24x32xf32>
    %7 = arith.mulf %6, %6 : vector<24x32xf32>
    %cst_2 = arith.constant dense<0.000000e+00> : vector<24xf32>
    %8 = vector.multi_reduction <add>, %7, %cst_2 [1] : vector<24x32xf32> to vector<24xf32>
    %9 = vector.shape_cast %8 : vector<24xf32> to vector<24x1xf32>
    %cst_3 = arith.constant 3.200000e+01 : f32
    %10 = vector.broadcast %cst_3 : f32 to vector<24x1xf32>
    %11 = arith.divf %9, %10 : vector<24x1xf32>
    %cst_4 = arith.constant 9.99999974E-6 : f32
    %12 = vector.broadcast %cst_4 : f32 to vector<24x1xf32>
    %13 = arith.addf %11, %12 : vector<24x1xf32>
    %14 = math.rsqrt %13 : vector<24x1xf32>
    %15 = vector.broadcast %14 : vector<24x1xf32> to vector<24x32xf32>
    %16 = arith.mulf %6, %15 : vector<24x32xf32>
    %c0_5 = arith.constant 0 : index
    %c0_6 = arith.constant 0 : index
    %17 = vector.load %arg2[%c0_5, %c0_6] : memref<1x32xf32, #tpu.memory_space<vmem>>, vector<1x32xf32>
    %18 = vector.broadcast %17 : vector<1x32xf32> to vector<24x32xf32>
    %19 = arith.mulf %16, %18 : vector<24x32xf32>
    %c0_7 = arith.constant 0 : index
    %c0_8 = arith.constant 0 : index
    %20 = vector.load %arg3[%c0_7, %c0_8] : memref<1x32xf32, #tpu.memory_space<vmem>>, vector<1x32xf32>
    %21 = vector.broadcast %20 : vector<1x32xf32> to vector<24x32xf32>
    %22 = arith.addf %19, %21 : vector<24x32xf32>
    %c0_9 = arith.constant 0 : index
    %c0_10 = arith.constant 0 : index
    %23 = vector.load %arg4[%c0_9, %c0_10] : memref<24x32xf32, #tpu.memory_space<vmem>>, vector<24x32xf32>
    tpu.vector_store %arg4[%c0_9, %c0_10], %22 {strides = array<i32>} : memref<24x32xf32, #tpu.memory_space<vmem>>, vector<24x32xf32>,
    return
  }
  func.func @transform_0(%arg0: i32) -> (i32, i32) {
    %c0_i32 = arith.constant 0 : i32
    %c0_i32_0 = arith.constant 0 : i32
    return %arg0, %c0_i32 : i32, i32
  }
  func.func @transform_1(%arg0: i32) -> (i32, i32) {
    %c0_i32 = arith.constant 0 : i32
    %c0_i32_0 = arith.constant 0 : i32
    %c0_i32_1 = arith.constant 0 : i32
    return %c0_i32, %c0_i32_0 : i32, i32
  }
  func.func @transform_2(%arg0: i32) -> (i32, i32) {
    %c0_i32 = arith.constant 0 : i32
    %c0_i32_0 = arith.constant 0 : i32
    %c0_i32_1 = arith.constant 0 : i32
    return %c0_i32, %c0_i32_0 : i32, i32
  }
  func.func @transform_3(%arg0: i32) -> (i32, i32) {
    %c0_i32 = arith.constant 0 : i32
    %c0_i32_0 = arith.constant 0 : i32
    return %arg0, %c0_i32 : i32, i32
  }
}

</mosaic_0001>

<llo_original>
// kernel: tpu_custom_call.1
$region0: #{tpu_custom_call.1}
  #allocation0 [shape = 'u32[]', space=smem, size = 0x4, offset = 0x4, fixed_abs, tag = 'smem constant byte address 0x4 - core index']
  #allocation1 [shape = 'u32[144,128]{1,0:T(1,128)}', space=vmem, size = 0x12000, scoped, tag = 'internal scratch']
  %s0 = inlined_call_operand.hbm [shape: f32[21,32], index: 0, kind: input, shape index: {}]
  %s1 = inlined_call_operand.vmem [shape: f32[1,32], index: 1, kind: input, shape index: {}]
  %s2 = inlined_call_operand.vmem [shape: f32[1,32], index: 2, kind: input, shape index: {}]
  %s3 = inlined_call_operand.hbm [shape: f32[21,32], index: 3, kind: output, shape index: {}]
  %s4 = sld [smem:[#allocation0]]
  $region26: #{tpu_custom_call.1} parent=0
    _
  %s6 = ssub.s32 1, %s4
  %s7 = scalar_select 0, %s6, %s4
  $region1: #{tpu_custom_call.1} parent=0
    #allocation2 [shape = 'u8[12288]{0}', space=vmem, size = 0x3000, scoped, tag = 'input window, operand 0, single buffered']
    #allocation3 [shape = 's32[1]{0}', space=sflag, size = 0x4, scoped, tag = 'scoped memory for tpu_custom_call.1']
    #allocation4 [shape = 's32[1]{0}', space=sflag, size = 0x4, scoped, tag = 'scoped memory for tpu_custom_call.1']
    #allocation5 [shape = 'u8[12288]{0}', space=vmem, size = 0x3000, scoped, tag = 'output window, operand 0, single buffered']
    %8 = vsyncpa [#allocation3], 0
    %9 = vsyncpa [#allocation4], 0
    // Predicated region
    $region2: #{tpu_custom_call.1} parent=1 // pred_check
      _
    $region3: #{tpu_custom_call.1} parent=1 // pred_check_branch
      %11 = sbr.rel (0) target = $region5
    $region4: #{tpu_custom_call.1} parent=1 // pred_region
      %s13 = ssub.s32 384, 384
      %14 = vsyncadd [#allocation3], %s13
      %s15 = sshll.u32 [#allocation2], 4
      %s16 = int_to_ptr.vmem [resolvable:$true] %s15
      %21 = dma.hbm_to_vmem [thread:$0]  %s0, 384, %s16, [#allocation3], 128, 128, 8
    $region5: #{tpu_custom_call.1} parent=1 // pred_fallthru
      _
    // Predicated region
    $region6: #{tpu_custom_call.1} parent=1 // pred_check
      _
    $region7: #{tpu_custom_call.1} parent=1 // pred_check_branch
      %23 = sbr.rel (0) target = $region9
    $region8: #{tpu_custom_call.1} parent=1 // pred_region
      _
    $region9: #{tpu_custom_call.1} parent=1 // pred_fallthru
      _
    // Predicated region
    $region10: #{tpu_custom_call.1} parent=1 // pred_check
      _
    $region11: #{tpu_custom_call.1} parent=1 // pred_check_branch
      %25 = sbr.rel (0) target = $region13
    $region12: #{tpu_custom_call.1} parent=1 // pred_region
      _
    $region13: #{tpu_custom_call.1} parent=1 // pred_fallthru
      _
    // Predicated region
    $region14: #{tpu_custom_call.1} parent=1 // pred_check
      _
    $region15: #{tpu_custom_call.1} parent=1 // pred_check_branch
      %27 = sbr.rel (0) target = $region17
    $region16: #{tpu_custom_call.1} parent=1 // pred_region
      %28 = dma.done [#allocation3], 384
    $region17: #{tpu_custom_call.1} parent=1 // pred_fallthru
      _
    %v29 = vld [vmem:[#allocation2] sm:$0xff]
    %v30 = vld [vmem:[#allocation2 + $0x8] sm:$0xff]
    %v31 = vld [vmem:[#allocation2 + $0x10] sm:$0xff]
    %vm32 = vcmask 261120
    %v33 = vsel %vm32, %v29, 0.0
    %34 = vadd.xlane.f32.xlu0 %v33
    %v35 = vpop.xlane.xlu0 %34
    %v36 = vsel %vm32, %v30, 0.0
    %37 = vadd.xlane.f32.xlu0 %v36
    %v38 = vpop.xlane.xlu0 %37
    %v39 = vsel %vm32, %v31, 0.0
    %40 = vadd.xlane.f32.xlu0 %v39
    %v41 = vpop.xlane.xlu0 %40
    %v42 = vrcp.pop 32.0
    %v43 = vmul.f32 %v35, %v42
    %v44 = vmul.f32 %v38, %v42
    %v45 = vmul.f32 %v41, %v42
    %v46 = vsub.f32 %v29, %v43
    %v47 = vsub.f32 %v30, %v44
    %v48 = vsub.f32 %v31, %v45
    %v49 = vmul.f32 %v46, %v46
    %v50 = vmul.f32 %v47, %v47
    %v51 = vmul.f32 %v48, %v48
    %v52 = vsel %vm32, %v49, 0.0
    %53 = vadd.xlane.f32.xlu0 %v52
    %v54 = vpop.xlane.xlu0 %53
    %v55 = vsel %vm32, %v50, 0.0
    %56 = vadd.xlane.f32.xlu0 %v55
    %v57 = vpop.xlane.xlu0 %56
    %v58 = vsel %vm32, %v51, 0.0
    %59 = vadd.xlane.f32.xlu0 %v58
    %v60 = vpop.xlane.xlu0 %59
    %v61 = vmul.f32 %v54, %v42
    %v62 = vmul.f32 %v57, %v42
    %v63 = vmul.f32 %v60, %v42
    %v64 = vadd.f32 %v61, 1e-05
    %v65 = vadd.f32 %v62, 1e-05
    %v66 = vadd.f32 %v63, 1e-05
    %v67 = vrsqrt.pop %v64
    %v68 = vrsqrt.pop %v65
    %v69 = vrsqrt.pop %v66
    %v70 = vmul.f32 %v46, %v67
    %v71 = vmul.f32 %v47, %v68
    %v72 = vmul.f32 %v48, %v69
    %v73 = vld [vmem:[%s1] sm:$0x1]
    %v75 = vlaneseq
    %v76 = vshrl.u32 %v75, 7
    %v77 = vsub.s32 0, %v76
    %v78 = vrot.slane %v73, %v77
    %v80 = vmul.f32 %v70, %v78
    %v81 = vmul.f32 %v71, %v78
    %v82 = vmul.f32 %v72, %v78
    %v83 = vld [vmem:[%s2] sm:$0x1]
    %v85 = vlaneseq
    %v86 = vshrl.u32 %v85, 7
    %v87 = vsub.s32 0, %v86
    %v88 = vrot.slane %v83, %v87
    %v90 = vadd.f32 %v80, %v88
    %v91 = vadd.f32 %v81, %v88
    %v92 = vadd.f32 %v82, %v88
    %93 = vst.msk [vmem:[#allocation5] sm:$0xff] %vm32, %v90
    %94 = vst.msk [vmem:[#allocation5 + $0x8] sm:$0xff] %vm32, %v91
    %95 = vst.msk [vmem:[#allocation5 + $0x10] sm:$0xff] %vm32, %v92
    // Predicated region
    $region18: #{tpu_custom_call.1} parent=1 // pred_check
      _
    $region19: #{tpu_custom_call.1} parent=1 // pred_check_branch
      %97 = sbr.rel (0) target = $region21
    $region20: #{tpu_custom_call.1} parent=1 // pred_region
      %s99 = ssub.s32 384, 384
      %100 = vsyncadd [#allocation4], %s99
      %s101 = sshll.u32 [#allocation5], 4
      %s102 = int_to_ptr.vmem [resolvable:$true] %s101
      %107 = dma.vmem_to_hbm [thread:$0]  %s102, 384, %s3, [#allocation4], 128, 128, 8
    $region21: #{tpu_custom_call.1} parent=1 // pred_fallthru
      _
    // Predicated region
    $region22: #{tpu_custom_call.1} parent=1 // pred_check
      _
    $region23: #{tpu_custom_call.1} parent=1 // pred_check_branch
      %109 = sbr.rel (0) target = $region25
    $region24: #{tpu_custom_call.1} parent=1 // pred_region
      %110 = dma.done [#allocation4], 384
    $region25: #{tpu_custom_call.1} parent=1 // pred_fallthru
      _
    %111 = vsyncpa [#allocation3], 1
    %112 = vsyncpa [#allocation4], 1

</llo_original>
